<compile_context>
chip_gen: v5e
topology: v5e:2x2
jax: 0.10.0
libtpu: 0.0.40
codegen_flags: <defaults>
</compile_context>

<pallas_src>
import functools

import jax
import jax.numpy as jnp
from jax import lax
from jax.experimental import pallas as pl
from jax.experimental.pallas import tpu as pltpu

_MIB = 1024 * 1024


def _round_up(a, b):
    return -(-a // b) * b


def _ffn_kernel(x_ref, w1_ref, w3_ref, w2_ref, o_ref, acc_ref):
    # x_ref:  (tm, dim)    activations (native dtype)
    # w1_ref: (fk, dim)    w1 chunk, PyTorch (out_features, in_features) layout
    # w3_ref: (fk, dim)    w3 chunk
    # w2_ref: (dim, fk)    w2 chunk
    # o_ref:  (tm, dim)    output tile (written on the last ffn chunk)
    # acc_ref:(tm, dim)    f32 accumulator across ffn chunks (grid axis 1)
    k = pl.program_id(1)
    nk = pl.num_programs(1)

    x = x_ref[...]
    # Contract x's feature axis with the weight's last axis (PyTorch layout, no
    # transpose op); MXU accumulates in f32 via preferred_element_type.
    dn = (((1,), (1,)), ((), ()))
    h1 = lax.dot_general(x, w1_ref[...], dn, preferred_element_type=jnp.float32)
    h3 = lax.dot_general(x, w3_ref[...], dn, preferred_element_type=jnp.float32)

    # SiLU(h1) * h3 in f32 (EUP sigmoid). Dropout is identity in eval mode.
    # TODO(synk): training-mode dropout would mask with pltpu.prng_random_bits.
    gated = (h1 * jax.nn.sigmoid(h1)) * h3

    # (tm, fk) x (dim, fk) contracted on fk -> (tm, dim), MXU in weight dtype.
    y = lax.dot_general(gated.astype(w2_ref.dtype), w2_ref[...], dn,
                        preferred_element_type=jnp.float32)

    @pl.when(k == 0)
    def _():
        acc_ref[...] = y          # direct write: no zero-fill + read-add pass

    @pl.when(k > 0)
    def _():
        acc_ref[...] += y

    @pl.when(k == nk - 1)
    def _():
        o_ref[...] = acc_ref[...].astype(o_ref.dtype)


def _vmem_budget():
    """(vmem_limit_bytes, per-step tile budget) chosen per TPU generation."""
    try:
        cap = pltpu.get_tpu_info().vmem_capacity_bytes
    except Exception:  # unknown / emulated target: assume the small (v7x) VMEM
        cap = 64 * _MIB
    if cap >= 128 * _MIB:            # v5e / v6e: 128 MiB physical VMEM
        return 100 * _MIB, 88 * _MIB
    return 56 * _MIB, 46 * _MIB      # v7x: 64 MiB physical VMEM


def _select_fk(ffn, fk_budget):
    """Pick the ffn chunk size. Returns (fk, padded_ffn); zero-pad is exact."""
    if ffn <= 128:
        return ffn, ffn
    fk_cap = min(max(128, (fk_budget // 128) * 128), _round_up(ffn, 128))
    if ffn % 128 == 0:
        # Prefer a 128-multiple dividing ffn (avoids the weight-padding copy)
        # as long as it is not far below the VMEM-budget cap.
        fk = fk_cap
        while fk >= 128:
            if ffn % fk == 0:
                if 2 * fk >= fk_cap:
                    return fk, ffn
                break
            fk -= 128
    # Otherwise pad ffn (once, outside the kernel) up to a multiple of fk_cap.
    return fk_cap, _round_up(ffn, fk_cap)


def _select_tiles(m, dim, ffn, x_item, w_item, budget):
    """Derive (tm, fk, padded_ffn) from a per-step VMEM formula including dim."""
    acc_row = 4 * dim                 # f32 accumulator (single-buffered)
    xo_row = 4 * dim * x_item         # x + out tiles (double-buffered)
    w_col = 6 * dim * w_item          # w1 + w3 + w2 chunks (double-buffered)
    fk_reserve = ffn if ffn <= 128 else min(256, _round_up(ffn, 128))

    # Largest 128-multiple M tile (arithmetic intensity ~ tm flops per weight
    # byte) that still leaves room for an ffn chunk of fk_reserve.
    tm = 1024
    while tm > 128 and tm * (xo_row + acc_row) + fk_reserve * w_col > budget:
        tm -= 128
    if m <= tm:
        tm = m                        # full-M block (block == array dim is legal)

    # Maximize the ffn chunk in the remaining budget: fewer k steps -> fewer
    # accumulator read-modify-write passes and fewer grid-step overheads.
    rem = budget - tm * (xo_row + acc_row)
    fk_budget = max(fk_reserve, rem // w_col)
    fk, ffn_pad = _select_fk(ffn, fk_budget)
    return tm, fk, ffn_pad


@functools.partial(jax.jit, static_argnames=("tm", "fk"))
def feed_forward(x, w1, w2, w3, *, tm=None, fk=None):
    """x: (batch, seq, dim). w1, w3: (ffn, dim). w2: (dim, ffn) (PyTorch layout)."""
    b, s, dim = x.shape
    ffn = w1.shape[0]
    m = b * s
    x2d = x.reshape(m, dim)

    vmem_limit, budget = _vmem_budget()
    tm_auto, fk_auto, ffn_pad = _select_tiles(
        m, dim, ffn, x.dtype.itemsize, w1.dtype.itemsize, budget)
    if tm is None:
        tm = tm_auto
    if fk is None:
        fk = fk_auto
    else:
        ffn_pad = _round_up(ffn, fk)

    # Zero-pad the hidden dim once if the chunk does not divide it: padded
    # hidden units contribute silu(0) * 0 through zero w2 columns == 0.
    if ffn_pad != ffn:
        w1 = jnp.pad(w1, ((0, ffn_pad - ffn), (0, 0)))
        w3 = jnp.pad(w3, ((0, ffn_pad - ffn), (0, 0)))
        w2 = jnp.pad(w2, ((0, 0), (0, ffn_pad - ffn)))

    nm = pl.cdiv(m, tm)               # ragged M handled by Pallas masked writes
    nk = ffn_pad // fk
    grid = (nm, nk)                   # ffn chunk axis = reduction, kept last

    itemsize = x.dtype.itemsize
    cost = pl.CostEstimate(
        flops=6 * m * dim * ffn,                                      # 3 matmuls
        transcendentals=m * ffn,                                      # sigmoid
        bytes_accessed=(m * dim * itemsize                            # x
                        + nm * 3 * dim * ffn_pad * w1.dtype.itemsize  # weights / M tile
                        + m * dim * itemsize))                        # out

    out2d = pl.pallas_call(
        _ffn_kernel,
        out_shape=jax.ShapeDtypeStruct((m, dim), x.dtype),
        grid_spec=pltpu.PrefetchScalarGridSpec(
            num_scalar_prefetch=0,
            grid=grid,
            in_specs=[
                pl.BlockSpec((tm, dim), lambda i, k: (i, 0)),   # x rows
                pl.BlockSpec((fk, dim), lambda i, k: (k, 0)),   # w1 chunk
                pl.BlockSpec((fk, dim), lambda i, k: (k, 0)),   # w3 chunk
                pl.BlockSpec((dim, fk), lambda i, k: (0, k)),   # w2 chunk
            ],
            out_specs=pl.BlockSpec((tm, dim), lambda i, k: (i, 0)),
            scratch_shapes=[pltpu.VMEM((tm, dim), jnp.float32)],
        ),
        compiler_params=pltpu.CompilerParams(
            dimension_semantics=("parallel", "arbitrary"),
            vmem_limit_bytes=vmem_limit,
        ),
        cost_estimate=cost,
    )(x2d, w1, w3, w2)
    # TODO(synk): when nm == 1 on v7x (decode-sized M), split the ffn reduction
    # across the 2 TensorCores with a final combine to use both cores.

    return out2d.reshape(b, s, dim)


def _ref_feed_forward(x, w1, w2, w3):
    # Pure-JAX reference matching the PyTorch module (eval mode), f32 math.
    xf = x.astype(jnp.float32)
    h1 = jnp.einsum("bsd,fd->bsf", xf, w1.astype(jnp.float32))
    h3 = jnp.einsum("bsd,fd->bsf", xf, w3.astype(jnp.float32))
    g = (h1 * jax.nn.sigmoid(h1)) * h3
    return jnp.einsum("bsf,df->bsd", g, w2.astype(jnp.float32))


if __name__ == "__main__":
    key = jax.random.PRNGKey(0)

    # --- Test 1: small f32 case, single ffn chunk, full-M block -------------
    batch, seq, dim, ffn_dim = 2, 8, 32, 64
    kx, k1, k2, k3, kb = jax.random.split(key, 5)
    x = jax.random.normal(kx, (batch, seq, dim), dtype=jnp.float32)
    b1 = 1.0 / jnp.sqrt(dim)
    b2 = 1.0 / jnp.sqrt(ffn_dim)
    w1 = jax.random.uniform(k1, (ffn_dim, dim), jnp.float32, -b1, b1)   # dim -> ffn
    w3 = jax.random.uniform(k3, (ffn_dim, dim), jnp.float32, -b1, b1)   # dim -> ffn
    w2 = jax.random.uniform(k2, (dim, ffn_dim), jnp.float32, -b2, b2)   # ffn -> dim

    out = jax.block_until_ready(feed_forward(x, w1, w2, w3))
    ref = _ref_feed_forward(x, w1, w2, w3)
    assert out.shape == (batch, seq, dim)
    assert jnp.allclose(out, ref, atol=1e-4, rtol=1e-4), "f32 mismatch vs reference"

    # --- Test 2: bf16, forced small tiles -> multi-chunk reduction + ragged M
    batch, seq, dim, ffn_dim = 2, 100, 128, 384      # m=200: partial last M block
    kx, k1, k2, k3 = jax.random.split(kb, 4)
    xb = jax.random.normal(kx, (batch, seq, dim), jnp.float32).astype(jnp.bfloat16)
    b1 = 1.0 / jnp.sqrt(dim)
    b2 = 1.0 / jnp.sqrt(ffn_dim)
    w1b = jax.random.uniform(k1, (ffn_dim, dim), jnp.float32, -b1, b1).astype(jnp.bfloat16)
    w3b = jax.random.uniform(k3, (ffn_dim, dim), jnp.float32, -b1, b1).astype(jnp.bfloat16)
    w2b = jax.random.uniform(k2, (dim, ffn_dim), jnp.float32, -b2, b2).astype(jnp.bfloat16)

    outb = jax.block_until_ready(feed_forward(xb, w1b, w2b, w3b, tm=128, fk=128))
    refb = _ref_feed_forward(xb, w1b, w2b, w3b)
    assert outb.shape == (batch, seq, dim)
    assert jnp.allclose(outb.astype(jnp.float32), refb, atol=3e-2, rtol=3e-2), \
        "bf16 mismatch vs reference"

    print("KERNEL_OK")
</pallas_src>

<mosaic_0001>
module attributes {stable_mosaic.version = 11 : i64} {
  func.func @_ffn_kernel(%arg0: i32, %arg1: i32, %arg2: memref<16x32xf32, #tpu.memory_space<vmem>>, %arg3: memref<64x32xf32, #tpu.memory_space<vmem>>, %arg4: memref<64x32xf32, #tpu.memory_space<vmem>>, %arg5: memref<32x64xf32, #tpu.memory_space<vmem>>, %arg6: memref<16x32xf32, #tpu.memory_space<vmem>>, %arg7: memref<16x32xf32, #tpu.memory_space<vmem>>) attributes {dimension_semantics = [#tpu.dimension_semantics<parallel>, #tpu.dimension_semantics<arbitrary>], iteration_bounds = array<i64: 1, 1>, scalar_prefetch = 0 : i64, scratch_operands = 1 : i64, tpu.core_type = #tpu.core_type<tc>, window_params = [{transform_indices = @transform_0, window_bounds = array<i64: 16, 32>}, {transform_indices = @transform_1, window_bounds = array<i64: 64, 32>}, {transform_indices = @transform_2, window_bounds = array<i64: 64, 32>}, {transform_indices = @transform_3, window_bounds = array<i64: 32, 64>}, {transform_indices = @transform_4, window_bounds = array<i64: 16, 32>}]} {
    %c0 = arith.constant 0 : index
    %c0_0 = arith.constant 0 : index
    %0 = vector.load %arg2[%c0, %c0_0] : memref<16x32xf32, #tpu.memory_space<vmem>>, vector<16x32xf32>
    %c0_1 = arith.constant 0 : index
    %c0_2 = arith.constant 0 : index
    %1 = vector.load %arg3[%c0_1, %c0_2] : memref<64x32xf32, #tpu.memory_space<vmem>>, vector<64x32xf32>
    %cst = arith.constant dense<0.000000e+00> : vector<16x64xf32>
    %2 = tpu.matmul %0, %1, %cst {dimension_numbers = #tpu.dot_dimension_numbers<[1], [1], [0], [0], [0, 0, 1, 0], [], []>} : vector<16x32xf32>, vector<64x32xf32>, vector<16x64xf32> -> vector<16x64xf32>
    %c0_3 = arith.constant 0 : index
    %c0_4 = arith.constant 0 : index
    %3 = vector.load %arg4[%c0_3, %c0_4] : memref<64x32xf32, #tpu.memory_space<vmem>>, vector<64x32xf32>
    %cst_5 = arith.constant dense<0.000000e+00> : vector<16x64xf32>
    %4 = tpu.matmul %0, %3, %cst_5 {dimension_numbers = #tpu.dot_dimension_numbers<[1], [1], [0], [0], [0, 0, 1, 0], [], []>} : vector<16x32xf32>, vector<64x32xf32>, vector<16x64xf32> -> vector<16x64xf32>
    %5 = arith.negf %2 : vector<16x64xf32>
    %6 = math.exp %5 : vector<16x64xf32>
    %cst_6 = arith.constant 1.000000e+00 : f32
    %7 = vector.broadcast %cst_6 : f32 to vector<16x64xf32>
    %8 = arith.addf %7, %6 : vector<16x64xf32>
    %9 = arith.divf %7, %8 : vector<16x64xf32>
    %10 = arith.mulf %2, %9 : vector<16x64xf32>
    %11 = arith.mulf %10, %4 : vector<16x64xf32>
    %c0_7 = arith.constant 0 : index
    %c0_8 = arith.constant 0 : index
    %12 = vector.load %arg5[%c0_7, %c0_8] : memref<32x64xf32, #tpu.memory_space<vmem>>, vector<32x64xf32>
    %cst_9 = arith.constant dense<0.000000e+00> : vector<16x32xf32>
    %13 = tpu.matmul %11, %12, %cst_9 {dimension_numbers = #tpu.dot_dimension_numbers<[1], [1], [0], [0], [0, 0, 1, 0], [], []>} : vector<16x64xf32>, vector<32x64xf32>, vector<16x32xf32> -> vector<16x32xf32>
    %c0_i32 = arith.constant 0 : i32
    %14 = arith.cmpi eq, %arg1, %c0_i32 : i32
    %15 = arith.extui %14 : i1 to i32
    %c0_i32_10 = arith.constant 0 : i32
    %16 = arith.cmpi ne, %15, %c0_i32_10 : i32
    scf.if %16 {
      %c0_15 = arith.constant 0 : index
      %c0_16 = arith.constant 0 : index
      %23 = vector.load %arg7[%c0_15, %c0_16] : memref<16x32xf32, #tpu.memory_space<vmem>>, vector<16x32xf32>
      tpu.vector_store %arg7[%c0_15, %c0_16], %13 {strides = array<i32>} : memref<16x32xf32, #tpu.memory_space<vmem>>, vector<16x32xf32>,
    } else {
    }
    %c0_i32_11 = arith.constant 0 : i32
    %17 = arith.cmpi sgt, %arg1, %c0_i32_11 : i32
    %18 = arith.extui %17 : i1 to i32
    %c0_i32_12 = arith.constant 0 : i32
    %19 = arith.cmpi ne, %18, %c0_i32_12 : i32
    scf.if %19 {
      %c0_15 = arith.constant 0 : index
      %c0_16 = arith.constant 0 : index
      %23 = vector.load %arg7[%c0_15, %c0_16] : memref<16x32xf32, #tpu.memory_space<vmem>>, vector<16x32xf32>
      %24 = arith.addf %23, %13 : vector<16x32xf32>
      %c0_17 = arith.constant 0 : index
      %c0_18 = arith.constant 0 : index
      %25 = vector.load %arg7[%c0_17, %c0_18] : memref<16x32xf32, #tpu.memory_space<vmem>>, vector<16x32xf32>
      tpu.vector_store %arg7[%c0_17, %c0_18], %24 {strides = array<i32>} : memref<16x32xf32, #tpu.memory_space<vmem>>, vector<16x32xf32>,
    } else {
    }
    %c0_i32_13 = arith.constant 0 : i32
    %20 = arith.cmpi eq, %arg1, %c0_i32_13 : i32
    %21 = arith.extui %20 : i1 to i32
    %c0_i32_14 = arith.constant 0 : i32
    %22 = arith.cmpi ne, %21, %c0_i32_14 : i32
    scf.if %22 {
      %c0_15 = arith.constant 0 : index
      %c0_16 = arith.constant 0 : index
      %23 = vector.load %arg7[%c0_15, %c0_16] : memref<16x32xf32, #tpu.memory_space<vmem>>, vector<16x32xf32>
      %c0_17 = arith.constant 0 : index
      %c0_18 = arith.constant 0 : index
      %24 = vector.load %arg6[%c0_17, %c0_18] : memref<16x32xf32, #tpu.memory_space<vmem>>, vector<16x32xf32>
      tpu.vector_store %arg6[%c0_17, %c0_18], %23 {strides = array<i32>} : memref<16x32xf32, #tpu.memory_space<vmem>>, vector<16x32xf32>,
    } else {
    }
    return
  }
  func.func @transform_0(%arg0: i32, %arg1: i32) -> (i32, i32) {
    %c0_i32 = arith.constant 0 : i32
    %c0_i32_0 = arith.constant 0 : i32
    return %arg0, %c0_i32 : i32, i32
  }
  func.func @transform_1(%arg0: i32, %arg1: i32) -> (i32, i32) {
    %c0_i32 = arith.constant 0 : i32
    %c0_i32_0 = arith.constant 0 : i32
    return %arg1, %c0_i32 : i32, i32
  }
  func.func @transform_2(%arg0: i32, %arg1: i32) -> (i32, i32) {
    %c0_i32 = arith.constant 0 : i32
    %c0_i32_0 = arith.constant 0 : i32
    return %arg1, %c0_i32 : i32, i32
  }
  func.func @transform_3(%arg0: i32, %arg1: i32) -> (i32, i32) {
    %c0_i32 = arith.constant 0 : i32
    %c0_i32_0 = arith.constant 0 : i32
    return %c0_i32, %arg1 : i32, i32
  }
  func.func @transform_4(%arg0: i32, %arg1: i32) -> (i32, i32) {
    %c0_i32 = arith.constant 0 : i32
    %c0_i32_0 = arith.constant 0 : i32
    return %arg0, %c0_i32 : i32, i32
  }
}

</mosaic_0001>

<llo_original>
// kernel: feed_forward.1
$region0: #{feed_forward.1}
  #allocation0 [shape = 'u32[]', space=smem, size = 0x4, offset = 0x4, fixed_abs, tag = 'smem constant byte address 0x4 - core index']
  #allocation1 [shape = 'u32[72,128]{1,0:T(1,128)}', space=vmem, size = 0x9000, scoped, tag = 'internal scratch']
  #allocation2 [shape = 'f32[16,32]{1,0:T(8,128)}', space=vmem, size = 0x2000, scoped, tag = 'scratch operand']
  %s0 = inlined_call_operand.vmem [shape: f32[16,32], index: 0, kind: input, shape index: {}]
  %s1 = inlined_call_operand.vmem [shape: f32[64,32], index: 1, kind: input, shape index: {}]
  %s2 = inlined_call_operand.vmem [shape: f32[64,32], index: 2, kind: input, shape index: {}]
  %s3 = inlined_call_operand.vmem [shape: f32[32,64], index: 3, kind: input, shape index: {}]
  %s4 = inlined_call_operand.hbm [shape: f32[16,32], index: 4, kind: output, shape index: {}]
  %s5 = sld [smem:[#allocation0]]
  $region38: #{feed_forward.1} parent=0
    _
  %s7 = ssub.s32 1, %s5
  %s8 = scalar_select 0, %s7, %s5
  $region1: #{feed_forward.1} parent=0
    #allocation3 [shape = 'u8[8192]{0}', space=vmem, size = 0x2000, scoped, tag = 'output window, operand 0, single buffered']
    #allocation4 [shape = 's32[1]{0}', space=sflag, size = 0x4, scoped, tag = 'scoped memory for feed_forward.1']
    %9 = vsyncpa [#allocation4], 0
    // Predicated region
    $region2: #{feed_forward.1} parent=1 // pred_check
      _
    $region3: #{feed_forward.1} parent=1 // pred_check_branch
      %11 = sbr.rel (0) target = $region5
    $region4: #{feed_forward.1} parent=1 // pred_region
      _
    $region5: #{feed_forward.1} parent=1 // pred_fallthru
      _
    // Predicated region
    $region6: #{feed_forward.1} parent=1 // pred_check
      _
    $region7: #{feed_forward.1} parent=1 // pred_check_branch
      %13 = sbr.rel (0) target = $region9
    $region8: #{feed_forward.1} parent=1 // pred_region
      _
    $region9: #{feed_forward.1} parent=1 // pred_fallthru
      _
    // Predicated region
    $region10: #{feed_forward.1} parent=1 // pred_check
      _
    $region11: #{feed_forward.1} parent=1 // pred_check_branch
      %15 = sbr.rel (0) target = $region13
    $region12: #{feed_forward.1} parent=1 // pred_region
      _
    $region13: #{feed_forward.1} parent=1 // pred_fallthru
      _
    // Predicated region
    $region14: #{feed_forward.1} parent=1 // pred_check
      _
    $region15: #{feed_forward.1} parent=1 // pred_check_branch
      %17 = sbr.rel (0) target = $region17
    $region16: #{feed_forward.1} parent=1 // pred_region
      _
    $region17: #{feed_forward.1} parent=1 // pred_fallthru
      _
    %v18 = vld [vmem:[%s0] sm:$0xff]
    %v19 = vld [vmem:[%s0 + $0x8] sm:$0xff]
    %v20 = vld [vmem:[%s1] sm:$0xff]
    %v21 = vld [vmem:[%s1 + $0x8] sm:$0xff]
    %v22 = vld [vmem:[%s1 + $0x10] sm:$0xff]
    %v23 = vld [vmem:[%s1 + $0x18] sm:$0xff]
    %v24 = vld [vmem:[%s1 + $0x20] sm:$0xff]
    %v25 = vld [vmem:[%s1 + $0x28] sm:$0xff]
    %v26 = vld [vmem:[%s1 + $0x30] sm:$0xff]
    %v27 = vld [vmem:[%s1 + $0x38] sm:$0xff]
    %vm28 = vcmask 261120
    %v30 = vsel %vm28, %v18, 0
    %v33 = vsel %vm28, %v19, 0
    %v36 = vsel %vm28, %v20, 0
    %v39 = vsel %vm28, %v21, 0
    %v42 = vsel %vm28, %v22, 0
    %v45 = vsel %vm28, %v23, 0
    %v48 = vsel %vm28, %v24, 0
    %v51 = vsel %vm28, %v25, 0
    %v54 = vsel %vm28, %v26, 0
    %v57 = vsel %vm28, %v27, 0
    %59 = vmatpush.xpose.msra.mxu0 0.0
    %60 = vmatpush.xpose.msra.mxu0 0.0
    %61 = vmatpush.xpose.msra.mxu0 0.0
    %62 = vmatpush.xpose.msra.mxu0 0.0
    %63 = vmatpush.xpose.msra.mxu0 0.0
    %64 = vmatpush.xpose.msra.mxu0 0.0
    %65 = vmatpush.xpose.msra.mxu0 0.0
    %66 = vmatpush.xpose.msra.mxu0 0.0
    %67 = vmatpush.xpose.msra.mxu0 %v57
    %68 = vmatpush.xpose.msra.mxu0 %v54
    %69 = vmatpush.xpose.msra.mxu0 %v51
    %70 = vmatpush.xpose.msra.mxu0 %v48
    %71 = vmatpush.xpose.msra.mxu0 %v45
    %72 = vmatpush.xpose.msra.mxu0 %v42
    %73 = vmatpush.xpose.msra.mxu0 %v39
    %74 = vmatpush.xpose.msra.mxu0 %v36
    %75 = vmatmul.f32.gmra.mxu0 %v30
    %v76 = vpop.f32.mrf.mxu0
    %v77 = vadd.f32 0.0, %v76
    %78 = vmatmul.f32.gmra.mxu0 %v33
    %v79 = vpop.f32.mrf.mxu0
    %v80 = vadd.f32 0.0, %v79
    %81 = vdwg.mxu0
    %v82 = vld [vmem:[%s2] sm:$0xff]
    %v83 = vld [vmem:[%s2 + $0x8] sm:$0xff]
    %v84 = vld [vmem:[%s2 + $0x10] sm:$0xff]
    %v85 = vld [vmem:[%s2 + $0x18] sm:$0xff]
    %v86 = vld [vmem:[%s2 + $0x20] sm:$0xff]
    %v87 = vld [vmem:[%s2 + $0x28] sm:$0xff]
    %v88 = vld [vmem:[%s2 + $0x30] sm:$0xff]
    %v89 = vld [vmem:[%s2 + $0x38] sm:$0xff]
    %v91 = vsel %vm28, %v82, 0
    %v94 = vsel %vm28, %v83, 0
    %v97 = vsel %vm28, %v84, 0
    %v100 = vsel %vm28, %v85, 0
    %v103 = vsel %vm28, %v86, 0
    %v106 = vsel %vm28, %v87, 0
    %v109 = vsel %vm28, %v88, 0
    %v112 = vsel %vm28, %v89, 0
    %114 = vmatpush.xpose.msra.mxu0 0.0
    %115 = vmatpush.xpose.msra.mxu0 0.0
    %116 = vmatpush.xpose.msra.mxu0 0.0
    %117 = vmatpush.xpose.msra.mxu0 0.0
    %118 = vmatpush.xpose.msra.mxu0 0.0
    %119 = vmatpush.xpose.msra.mxu0 0.0
    %120 = vmatpush.xpose.msra.mxu0 0.0
    %121 = vmatpush.xpose.msra.mxu0 0.0
    %122 = vmatpush.xpose.msra.mxu0 %v112
    %123 = vmatpush.xpose.msra.mxu0 %v109
    %124 = vmatpush.xpose.msra.mxu0 %v106
    %125 = vmatpush.xpose.msra.mxu0 %v103
    %126 = vmatpush.xpose.msra.mxu0 %v100
    %127 = vmatpush.xpose.msra.mxu0 %v97
    %128 = vmatpush.xpose.msra.mxu0 %v94
    %129 = vmatpush.xpose.msra.mxu0 %v91
    %130 = vmatmul.f32.gmra.mxu0 %v30
    %v131 = vpop.f32.mrf.mxu0
    %v132 = vadd.f32 0.0, %v131
    %133 = vmatmul.f32.gmra.mxu0 %v33
    %v134 = vpop.f32.mrf.mxu0
    %v135 = vadd.f32 0.0, %v134
    %136 = vdwg.mxu0
    %v137 = vxor.u32 %v77, 2147483648
    %v138 = vxor.u32 %v80, 2147483648
    %v139 = vmul.f32 %v137, 1.442695
    %v140 = vpow.pop %v139
    %v141 = vmul.f32 %v138, 1.442695
    %v142 = vpow.pop %v141
    %v143 = vadd.f32 %v140, 1.0
    %v144 = vadd.f32 %v142, 1.0
    %v145 = vrcp.pop %v143
    %v146 = vmul.f32 %v143, %v145
    %v147 = vsub.f32 1.0, %v146
    %v148 = vmul.f32 %v145, %v147
    %v149 = vadd.f32 %v145, %v148
    %vm150 = vweird.f32 %v143
    %vm151 = vweird.f32 %v145
    %vm152 = vmor %vm150, %vm151
    %v153 = vsel %vm152, %v145, %v149
    %v154 = vand.u32 2147483647, %v143
    %vm155 = vcmp.eq.f32.partialorder %v154, 8.507059e+37
    %v156 = vand.u32 %v143, 2147483648
    %v157 = vor.u32 1.1754944e-38, %v156
    %v158 = vsel %vm155, %v157, %v153
    %v159 = vmul.f32 1.0, %v158
    %v160 = vrcp.pop %v144
    %v161 = vmul.f32 %v144, %v160
    %v162 = vsub.f32 1.0, %v161
    %v163 = vmul.f32 %v160, %v162
    %v164 = vadd.f32 %v160, %v163
    %vm165 = vweird.f32 %v144
    %vm166 = vweird.f32 %v160
    %vm167 = vmor %vm165, %vm166
    %v168 = vsel %vm167, %v160, %v164
    %v169 = vand.u32 2147483647, %v144
    %vm170 = vcmp.eq.f32.partialorder %v169, 8.507059e+37
    %v171 = vand.u32 %v144, 2147483648
    %v172 = vor.u32 1.1754944e-38, %v171
    %v173 = vsel %vm170, %v172, %v168
    %v174 = vmul.f32 1.0, %v173
    %v175 = vmul.f32 %v77, %v159
    %v176 = vmul.f32 %v80, %v174
    %v177 = vmul.f32 %v175, %v132
    %v178 = vmul.f32 %v176, %v135
    %v179 = vld [vmem:[%s3] sm:$0xff]
    %v180 = vld [vmem:[%s3 + $0x8] sm:$0xff]
    %v181 = vld [vmem:[%s3 + $0x10] sm:$0xff]
    %v182 = vld [vmem:[%s3 + $0x18] sm:$0xff]
    %vm183 = vcmask 523264
    %v185 = vsel %vm183, %v177, 0
    %v188 = vsel %vm183, %v178, 0
    %v191 = vsel %vm183, %v179, 0
    %v194 = vsel %vm183, %v180, 0
    %v197 = vsel %vm183, %v181, 0
    %v200 = vsel %vm183, %v182, 0
    %202 = vmatpush.xpose.msra.mxu0 0.0
    %203 = vmatpush.xpose.msra.mxu0 0.0
    %204 = vmatpush.xpose.msra.mxu0 0.0
    %205 = vmatpush.xpose.msra.mxu0 0.0
    %206 = vmatpush.xpose.msra.mxu0 0.0
    %207 = vmatpush.xpose.msra.mxu0 0.0
    %208 = vmatpush.xpose.msra.mxu0 0.0
    %209 = vmatpush.xpose.msra.mxu0 0.0
    %210 = vmatpush.xpose.msra.mxu0 0.0
    %211 = vmatpush.xpose.msra.mxu0 0.0
    %212 = vmatpush.xpose.msra.mxu0 0.0
    %213 = vmatpush.xpose.msra.mxu0 0.0
    %214 = vmatpush.xpose.msra.mxu0 %v200
    %215 = vmatpush.xpose.msra.mxu0 %v197
    %216 = vmatpush.xpose.msra.mxu0 %v194
    %217 = vmatpush.xpose.msra.mxu0 %v191
    %218 = vmatmul.f32.gmra.mxu0 %v185
    %v219 = vpop.f32.mrf.mxu0
    %v220 = vadd.f32 0.0, %v219
    %221 = vmatmul.f32.gmra.mxu0 %v188
    %v222 = vpop.f32.mrf.mxu0
    %v223 = vadd.f32 0.0, %v222
    %224 = vdwg.mxu0
    %p225 = scmp.eq.s32.totalorder 0, 0
    // Predicated region
    $region18: #{feed_forward.1} parent=1 // pred_check
      %p226 = pneg %p225
    $region19: #{feed_forward.1} parent=1 // pred_check_branch
      %228 = sbr.rel (%p226) target = $region21
    $region20: #{feed_forward.1} parent=1 // pred_region
      %229 = vst.msk [vmem:[#allocation2] sm:$0xff] %vm28, %v220
      %230 = vst.msk [vmem:[#allocation2 + $0x8] sm:$0xff] %vm28, %v223
    $region21: #{feed_forward.1} parent=1 // pred_fallthru
      _
    %p231 = scmp.gt.s32.totalorder 0, 0
    // Predicated region
    $region22: #{feed_forward.1} parent=1 // pred_check
      %p232 = pneg %p231
    $region23: #{feed_forward.1} parent=1 // pred_check_branch
      %234 = sbr.rel (%p232) target = $region25
    $region24: #{feed_forward.1} parent=1 // pred_region
      %v235 = vld [vmem:[#allocation2] sm:$0xff]
      %v236 = vld [vmem:[#allocation2 + $0x8] sm:$0xff]
      %v237 = vadd.f32 %v235, %v220
      %v238 = vadd.f32 %v236, %v223
      %239 = vst.msk [vmem:[#allocation2] sm:$0xff] %vm28, %v237
      %240 = vst.msk [vmem:[#allocation2 + $0x8] sm:$0xff] %vm28, %v238
    $region25: #{feed_forward.1} parent=1 // pred_fallthru
      _
    // Predicated region
    $region26: #{feed_forward.1} parent=1 // pred_check
      %p241 = pneg %p225
    $region27: #{feed_forward.1} parent=1 // pred_check_branch
      %243 = sbr.rel (%p241) target = $region29
    $region28: #{feed_forward.1} parent=1 // pred_region
      %v244 = vld [vmem:[#allocation2] sm:$0xff]
      %v245 = vld [vmem:[#allocation2 + $0x8] sm:$0xff]
      %246 = vst.msk [vmem:[#allocation3] sm:$0xff] %vm28, %v244
      %247 = vst.msk [vmem:[#allocation3 + $0x8] sm:$0xff] %vm28, %v245
    $region29: #{feed_forward.1} parent=1 // pred_fallthru
      _
    // Predicated region
    $region30: #{feed_forward.1} parent=1 // pred_check
      _
    $region31: #{feed_forward.1} parent=1 // pred_check_branch
      %249 = sbr.rel (0) target = $region33
    $region32: #{feed_forward.1} parent=1 // pred_region
      %251 = vsyncadd [#allocation4], 0
      %s252 = sshll.u32 [#allocation3], 4
      %s253 = int_to_ptr.vmem [resolvable:$true] %s252
      %s254 = sshll.u32 %s4, 4
      %s255 = int_to_ptr.hbm [resolvable:$true] %s254
      %260 = dma.vmem_to_hbm [thread:$0]  %s253, 256, %s255, [#allocation4], 128, 128, 8
    $region33: #{feed_forward.1} parent=1 // pred_fallthru
      _
    // Predicated region
    $region34: #{feed_forward.1} parent=1 // pred_check
      _
    $region35: #{feed_forward.1} parent=1 // pred_check_branch
      %262 = sbr.rel (0) target = $region37
    $region36: #{feed_forward.1} parent=1 // pred_region
      %264 = dma.done [#allocation4], 256
    $region37: #{feed_forward.1} parent=1 // pred_fallthru
      _
    %265 = vsyncpa [#allocation4], 1

</llo_original>
